<compile_context>
chip_gen: v5e
topology: v5e:2x2
jax: 0.10.0
libtpu: 0.0.40
codegen_flags: <defaults>
</compile_context>

<pallas_src>
import jax
import jax.numpy as jnp
from jax.experimental import pallas as pl
from jax.experimental.pallas import tpu as pltpu

_LANE = 128
_SUBLANE = 8


def _round_up(x: int, m: int) -> int:
    return (x + m - 1) // m * m


def _cdiv(a: int, b: int) -> int:
    return (a + b - 1) // b


def _make_kernel(TL: int, L: int):
    """Kernel closure over static tile width TL and true row length L."""
    n_lane_slices = TL // _LANE

    def kernel(pred_ref, label_ref, out_ref):
        j = pl.program_id(1)  # lane-chunk axis (reduction axis, innermost)

        @pl.when(j == 0)
        def _():
            out_ref[...] = jnp.zeros_like(out_ref)

        pred = pred_ref[...].astype(jnp.float32)    # (TB, TL)
        label = label_ref[...].astype(jnp.float32)  # (TB, TL)

        # Ignore entries where label == -1 (PyTorch mask) and the ragged lane
        # tail of the last chunk (global column index >= L, unspecified data).
        col = j * TL + jax.lax.broadcasted_iota(jnp.int32, pred.shape, 1)
        valid = (label != -1.0) & (col < L)
        absdiff = jnp.abs(jnp.where(valid, pred - label, jnp.float32(0.0)))

        # Lane-wide VPU accumulation into the (TB, 128) output block.  No
        # per-step XLU cross-lane reduce; final 128->1 sum is done in the
        # wrapper.  Static 128-wide slices are free vreg selections.
        acc = out_ref[...]
        for c in range(n_lane_slices):
            acc = acc + absdiff[:, c * _LANE:(c + 1) * _LANE]
        out_ref[...] = acc

    return kernel


def l1_distance_loss(predictions, label_batch, length_batch):
    """Returns (batch_loss, total_sents) exactly like the PyTorch module."""
    B, S, _ = predictions.shape
    L = S * S

    # Flatten each sentence's distance matrix into a lane-dense row (free).
    pred = predictions.reshape(B, L)
    label = label_batch.reshape(B, L)
    itemsize = max(pred.dtype.itemsize, label.dtype.itemsize)

    # --- Tiling: lane-dense ~4 MiB input tiles, no physical padding. ---
    TILE_BYTES = 4 << 20   # per input tile; 2 inputs x 2 buffers ~ 16 MiB VMEM
    MAX_TL = 8192          # lanes per chunk cap (multiple of 128)
    TL = min(_round_up(max(L, _LANE), _LANE), MAX_TL)
    n_lane_chunks = _cdiv(L, TL)

    if B < _SUBLANE:
        # Block row dim equal to the full array dim is allowed; tiny batch.
        TB = B
    else:
        B8 = _round_up(B, _SUBLANE)
        TB = max(_SUBLANE, (TILE_BYTES // (TL * itemsize)) // _SUBLANE * _SUBLANE)
        TB = min(TB, B8)
        if B8 >= 2 * _SUBLANE:
            # Guarantee >= 2 programs on the "parallel" batch axis so both
            # v7x TensorCores get work (no-op on 1-TC v5e/v6e).
            TB = min(TB, _round_up(B8 // 2, _SUBLANE))
    n_batch_tiles = _cdiv(B, TB)
    out_rows = n_batch_tiles * TB

    grid = (n_batch_tiles, n_lane_chunks)
    kernel = _make_kernel(TL, L)

    cost = pl.CostEstimate(
        flops=4 * B * L,
        transcendentals=0,
        bytes_accessed=B * L * (pred.dtype.itemsize + label.dtype.itemsize)
        + out_rows * _LANE * 4,
    )

    partial = pl.pallas_call(
        kernel,
        grid=grid,
        in_specs=[
            pl.BlockSpec((TB, TL), lambda i, j: (i, j)),
            pl.BlockSpec((TB, TL), lambda i, j: (i, j)),
        ],
        out_specs=pl.BlockSpec((TB, _LANE), lambda i, j: (i, 0)),
        out_shape=jax.ShapeDtypeStruct((out_rows, _LANE), jnp.float32),
        compiler_params=pltpu.CompilerParams(
            dimension_semantics=("parallel", "arbitrary"),
            vmem_limit_bytes=40 << 20,  # < v7x 64 MiB physical, covers 4 MiB tiles
        ),
        cost_estimate=cost,
    )(pred, label)

    # --- Finalize (B scalars): lane reduce, normalize, average over batch. ---
    loss_per_sent = jnp.sum(partial[:B], axis=1)          # (B,)
    len_f = length_batch.astype(jnp.float32)
    valid = len_f != 0.0
    sq_len = jnp.where(valid, len_f * len_f, 1.0)          # guard 0/0
    normalized = jnp.where(valid, loss_per_sent / sq_len, 0.0)
    total_sents = jnp.sum(valid.astype(jnp.float32))
    batch_loss = jnp.where(
        total_sents > 0.0,
        jnp.sum(normalized) / jnp.maximum(total_sents, 1.0),
        jnp.float32(0.0),
    )
    return batch_loss, total_sents


def _reference(predictions, labels, lengths):
    """Pure-JAX mirror of the PyTorch forward (f32 math)."""
    p = predictions.astype(jnp.float32)
    l = labels.astype(jnp.float32)
    mask = (l != -1.0).astype(jnp.float32)
    per_sent = jnp.sum(jnp.abs(p * mask - l * mask), axis=(1, 2))
    total = jnp.sum((lengths != 0).astype(jnp.float32))
    loss = jnp.sum(per_sent / (lengths.astype(jnp.float32) ** 2)) / total
    return loss, total


if __name__ == "__main__":
    key = jax.random.PRNGKey(0)

    # --- Test 1: small f32 batch (B=2, S=16). ---
    B, S = 2, 16
    k1, k2, k3, k4 = jax.random.split(key, 4)
    predictions = jax.random.normal(k1, (B, S, S), dtype=jnp.float32)
    lengths = jnp.array([10, 7], dtype=jnp.int32)
    labels = jnp.abs(jax.random.normal(k2, (B, S, S), dtype=jnp.float32))
    idx = jnp.arange(S)
    valid = (idx[None, :, None] < lengths[:, None, None]) & (
        idx[None, None, :] < lengths[:, None, None])
    labels = jnp.where(valid, labels, -1.0)

    batch_loss, total_sents = l1_distance_loss(predictions, labels, lengths)
    jax.block_until_ready((batch_loss, total_sents))
    ref_loss, ref_total = _reference(predictions, labels, lengths)
    assert jnp.allclose(batch_loss, ref_loss, rtol=1e-5, atol=1e-5), (batch_loss, ref_loss)
    assert jnp.allclose(total_sents, ref_total), (total_sents, ref_total)

    # --- Test 2: ragged bf16 batch (B=10, S=20 -> L=400, partial blocks + tail mask). ---
    B2, S2 = 10, 20
    predictions2 = jax.random.normal(k3, (B2, S2, S2), dtype=jnp.bfloat16)
    lengths2 = jnp.array([12, 20, 5, 17, 9, 1, 20, 3, 14, 7], dtype=jnp.int32)
    labels2 = jnp.abs(jax.random.normal(k4, (B2, S2, S2), dtype=jnp.float32))
    idx2 = jnp.arange(S2)
    valid2 = (idx2[None, :, None] < lengths2[:, None, None]) & (
        idx2[None, None, :] < lengths2[:, None, None])
    labels2 = jnp.where(valid2, labels2, -1.0).astype(jnp.bfloat16)

    batch_loss2, total_sents2 = l1_distance_loss(predictions2, labels2, lengths2)
    jax.block_until_ready((batch_loss2, total_sents2))
    ref_loss2, ref_total2 = _reference(predictions2, labels2, lengths2)
    assert jnp.allclose(batch_loss2, ref_loss2, rtol=1e-4, atol=1e-5), (batch_loss2, ref_loss2)
    assert jnp.allclose(total_sents2, ref_total2), (total_sents2, ref_total2)

    print("KERNEL_OK")
</pallas_src>

<mosaic_0001>
module attributes {stable_mosaic.version = 11 : i64} {
  func.func @kernel(%arg0: i32, %arg1: i32, %arg2: memref<2x256xf32, #tpu.memory_space<vmem>>, %arg3: memref<2x256xf32, #tpu.memory_space<vmem>>, %arg4: memref<2x128xf32, #tpu.memory_space<vmem>>) attributes {dimension_semantics = [#tpu.dimension_semantics<parallel>, #tpu.dimension_semantics<arbitrary>], iteration_bounds = array<i64: 1, 1>, scalar_prefetch = 0 : i64, scratch_operands = 0 : i64, tpu.core_type = #tpu.core_type<tc>, window_params = [{transform_indices = @transform_0, window_bounds = array<i64: 2, 256>}, {transform_indices = @transform_1, window_bounds = array<i64: 2, 256>}, {transform_indices = @transform_2, window_bounds = array<i64: 2, 128>}]} {
    %c0_i32 = arith.constant 0 : i32
    %0 = arith.cmpi eq, %arg1, %c0_i32 : i32
    %1 = arith.extui %0 : i1 to i32
    %c0_i32_0 = arith.constant 0 : i32
    %2 = arith.cmpi ne, %1, %c0_i32_0 : i32
    scf.if %2 {
      %cst_10 = arith.constant 0.000000e+00 : f32
      %24 = vector.broadcast %cst_10 : f32 to vector<2x128xf32>
      %c0_11 = arith.constant 0 : index
      %c0_12 = arith.constant 0 : index
      %25 = vector.load %arg4[%c0_11, %c0_12] : memref<2x128xf32, #tpu.memory_space<vmem>>, vector<2x128xf32>
      tpu.vector_store %arg4[%c0_11, %c0_12], %24 {strides = array<i32>} : memref<2x128xf32, #tpu.memory_space<vmem>>, vector<2x128xf32>,
    } else {
    }
    %c0 = arith.constant 0 : index
    %c0_1 = arith.constant 0 : index
    %3 = vector.load %arg2[%c0, %c0_1] : memref<2x256xf32, #tpu.memory_space<vmem>>, vector<2x256xf32>
    %c0_2 = arith.constant 0 : index
    %c0_3 = arith.constant 0 : index
    %4 = vector.load %arg3[%c0_2, %c0_3] : memref<2x256xf32, #tpu.memory_space<vmem>>, vector<2x256xf32>
    %c256_i32 = arith.constant 256 : i32
    %5 = arith.muli %arg1, %c256_i32 : i32
    %6 = tpu.iota {dimensions = array<i32: 1>} : vector<2x256xi32>
    %7 = vector.broadcast %5 : i32 to vector<2x256xi32>
    %8 = arith.addi %7, %6 : vector<2x256xi32>
    %cst = arith.constant -1.000000e+00 : f32
    %9 = vector.broadcast %cst : f32 to vector<2x256xf32>
    %10 = arith.cmpf one, %4, %9 : vector<2x256xf32>
    %c256_i32_4 = arith.constant 256 : i32
    %11 = vector.broadcast %c256_i32_4 : i32 to vector<2x256xi32>
    %12 = arith.cmpi slt, %8, %11 : vector<2x256xi32>
    %13 = arith.andi %10, %12 : vector<2x256xi1>
    %14 = arith.subf %3, %4 : vector<2x256xf32>
    %cst_5 = arith.constant 0.000000e+00 : f32
    %15 = vector.broadcast %cst_5 : f32 to vector<2x256xf32>
    %16 = arith.select %13, %14, %15 : vector<2x256xi1>, vector<2x256xf32>
    %17 = math.absf %16 : vector<2x256xf32>
    %c0_6 = arith.constant 0 : index
    %c0_7 = arith.constant 0 : index
    %18 = vector.load %arg4[%c0_6, %c0_7] : memref<2x128xf32, #tpu.memory_space<vmem>>, vector<2x128xf32>
    %19 = vector.extract_strided_slice %17 {offsets = [0, 0], sizes = [2, 128], strides = [1, 1]} : vector<2x256xf32> to vector<2x128xf32>
    %20 = arith.addf %18, %19 : vector<2x128xf32>
    %21 = vector.extract_strided_slice %17 {offsets = [0, 128], sizes = [2, 128], strides = [1, 1]} : vector<2x256xf32> to vector<2x128xf32>
    %22 = arith.addf %20, %21 : vector<2x128xf32>
    %c0_8 = arith.constant 0 : index
    %c0_9 = arith.constant 0 : index
    %23 = vector.load %arg4[%c0_8, %c0_9] : memref<2x128xf32, #tpu.memory_space<vmem>>, vector<2x128xf32>
    tpu.vector_store %arg4[%c0_8, %c0_9], %22 {strides = array<i32>} : memref<2x128xf32, #tpu.memory_space<vmem>>, vector<2x128xf32>,
    return
  }
  func.func @transform_0(%arg0: i32, %arg1: i32) -> (i32, i32) {
    %c0_i32 = arith.constant 0 : i32
    return %arg0, %arg1 : i32, i32
  }
  func.func @transform_1(%arg0: i32, %arg1: i32) -> (i32, i32) {
    %c0_i32 = arith.constant 0 : i32
    return %arg0, %arg1 : i32, i32
  }
  func.func @transform_2(%arg0: i32, %arg1: i32) -> (i32, i32) {
    %c0_i32 = arith.constant 0 : i32
    %c0_i32_0 = arith.constant 0 : i32
    return %arg0, %c0_i32 : i32, i32
  }
}

</mosaic_0001>

<llo_original>
// kernel: tpu_custom_call.1
$region0: #{tpu_custom_call.1}
  #allocation0 [shape = 'u32[]', space=smem, size = 0x4, offset = 0x4, fixed_abs, tag = 'smem constant byte address 0x4 - core index']
  #allocation1 [shape = 'u32[72,128]{1,0:T(1,128)}', space=vmem, size = 0x9000, scoped, tag = 'internal scratch']
  %s0 = inlined_call_operand.hbm [shape: f32[2,256], index: 0, kind: input, shape index: {}]
  %s1 = inlined_call_operand.hbm [shape: f32[2,256], index: 1, kind: input, shape index: {}]
  %s2 = inlined_call_operand.hbm [shape: f32[2,128], index: 2, kind: output, shape index: {}]
  %s3 = sld [smem:[#allocation0]]
  $region30: #{tpu_custom_call.1} parent=0
    _
  %s5 = ssub.s32 1, %s3
  %s6 = scalar_select 0, %s5, %s3
  $region1: #{tpu_custom_call.1} parent=0
    #allocation2 [shape = 'u8[2048]{0}', space=vmem, size = 0x800, scoped, tag = 'input window, operand 0, single buffered']
    #allocation3 [shape = 's32[1]{0}', space=sflag, size = 0x4, scoped, tag = 'scoped memory for tpu_custom_call.1']
    #allocation4 [shape = 's32[1]{0}', space=sflag, size = 0x4, scoped, tag = 'scoped memory for tpu_custom_call.1']
    #allocation5 [shape = 'u8[2048]{0}', space=vmem, size = 0x800, scoped, tag = 'input window, operand 1, single buffered']
    #allocation6 [shape = 's32[1]{0}', space=sflag, size = 0x4, scoped, tag = 'scoped memory for tpu_custom_call.1']
    #allocation7 [shape = 'u8[1024]{0}', space=vmem, size = 0x400, scoped, tag = 'output window, operand 0, single buffered']
    %7 = vsyncpa [#allocation3], 0
    %8 = vsyncpa [#allocation6], 0
    %9 = vsyncpa [#allocation4], 0
    // Predicated region
    $region2: #{tpu_custom_call.1} parent=1 // pred_check
      _
    $region3: #{tpu_custom_call.1} parent=1 // pred_check_branch
      %11 = sbr.rel (0) target = $region5
    $region4: #{tpu_custom_call.1} parent=1 // pred_region
      %13 = vsyncadd [#allocation3], 0
      %s15 = sshll.u32 %s0, 4
      %s16 = int_to_ptr.hbm [resolvable:$true] %s15
      %s17 = sshll.u32 [#allocation2], 4
      %s18 = int_to_ptr.vmem [resolvable:$true] %s17
      %20 = dma.hbm_to_vmem [thread:$0]  %s16, 64, %s18, [#allocation3]
    $region5: #{tpu_custom_call.1} parent=1 // pred_fallthru
      _
    // Predicated region
    $region6: #{tpu_custom_call.1} parent=1 // pred_check
      _
    $region7: #{tpu_custom_call.1} parent=1 // pred_check_branch
      %22 = sbr.rel (0) target = $region9
    $region8: #{tpu_custom_call.1} parent=1 // pred_region
      %24 = vsyncadd [#allocation6], 0
      %s26 = sshll.u32 %s1, 4
      %s27 = int_to_ptr.hbm [resolvable:$true] %s26
      %s28 = sshll.u32 [#allocation5], 4
      %s29 = int_to_ptr.vmem [resolvable:$true] %s28
      %31 = dma.hbm_to_vmem [thread:$0]  %s27, 64, %s29, [#allocation6]
    $region9: #{tpu_custom_call.1} parent=1 // pred_fallthru
      _
    // Predicated region
    $region10: #{tpu_custom_call.1} parent=1 // pred_check
      _
    $region11: #{tpu_custom_call.1} parent=1 // pred_check_branch
      %33 = sbr.rel (0) target = $region13
    $region12: #{tpu_custom_call.1} parent=1 // pred_region
      %35 = dma.done [#allocation3], 64
    $region13: #{tpu_custom_call.1} parent=1 // pred_fallthru
      _
    // Predicated region
    $region14: #{tpu_custom_call.1} parent=1 // pred_check
      _
    $region15: #{tpu_custom_call.1} parent=1 // pred_check_branch
      %37 = sbr.rel (0) target = $region17
    $region16: #{tpu_custom_call.1} parent=1 // pred_region
      %39 = dma.done [#allocation6], 64
    $region17: #{tpu_custom_call.1} parent=1 // pred_fallthru
      _
    %p40 = scmp.eq.s32.totalorder 0, 0
    // Predicated region
    $region18: #{tpu_custom_call.1} parent=1 // pred_check
      %p41 = pneg %p40
    $region19: #{tpu_custom_call.1} parent=1 // pred_check_branch
      %43 = sbr.rel (%p41) target = $region21
    $region20: #{tpu_custom_call.1} parent=1 // pred_region
      %44 = vst [vmem:[#allocation7] sm:$0x3] 0.0
    $region21: #{tpu_custom_call.1} parent=1 // pred_fallthru
      _
    %v45 = vld [vmem:[#allocation2] sm:$0xf]
    %v46 = vld [vmem:[#allocation5] sm:$0xf]
    %s47 = smul.u32 0, 256
    %v48 = vlaneseq
    %v49 = vand.u32 %v48, 127
    %v50 = vadd.s32 %v49, 128
    %v51 = vstv %s47
    %v52 = vadd.s32 %v51, %v49
    %v53 = vadd.s32 %v51, %v50
    %vm54 = vcmp.ne.f32.partialorder %v46, -1.0
    %vm55 = vcmp.lt.s32.totalorder %v52, 256
    %vm56 = vcmp.lt.s32.totalorder %v53, 256
    %v57 = vsel %vm55, 1, 0
    %v58 = vsel %vm56, 1, 0
    %v59 = vrot.slane %v58, 6
    %vm60 = vcmask 1041408
    %v61 = vsel %vm60, %v57, %v59
    %vm62 = vcmp.ne.s32.totalorder %v61, 0
    %vm63 = vmand %vm54, %vm62
    %v64 = vsub.f32 %v45, %v46
    %v65 = vsel %vm63, %v64, 0.0
    %v66 = vand.u32 2147483647, %v65
    %v67 = vld [vmem:[#allocation7] sm:$0x3]
    %v68 = vadd.f32 %v67, %v66
    %70 = vst [vmem:[#allocation1] ss:$4 sm:$0xff] %v66
    %v71 = vld.sshfl [vmem:[#allocation1 + $0x8] sm:$0xff pattern:$0x73625140]
    %v73 = vadd.f32 %v68, %v71
    %74 = vst [vmem:[#allocation7] sm:$0x3] %v73
    // Predicated region
    $region22: #{tpu_custom_call.1} parent=1 // pred_check
      _
    $region23: #{tpu_custom_call.1} parent=1 // pred_check_branch
      %76 = sbr.rel (0) target = $region25
    $region24: #{tpu_custom_call.1} parent=1 // pred_region
      %78 = vsyncadd [#allocation4], 0
      %s80 = sshll.u32 [#allocation7], 4
      %s81 = int_to_ptr.vmem [resolvable:$true] %s80
      %s82 = sshll.u32 %s2, 4
      %s83 = int_to_ptr.hbm [resolvable:$true] %s82
      %85 = dma.vmem_to_hbm [thread:$0]  %s81, 32, %s83, [#allocation4]
    $region25: #{tpu_custom_call.1} parent=1 // pred_fallthru
      _
    // Predicated region
    $region26: #{tpu_custom_call.1} parent=1 // pred_check
      _
    $region27: #{tpu_custom_call.1} parent=1 // pred_check_branch
      %87 = sbr.rel (0) target = $region29
    $region28: #{tpu_custom_call.1} parent=1 // pred_region
      %89 = dma.done [#allocation4], 32
    $region29: #{tpu_custom_call.1} parent=1 // pred_fallthru
      _
    %90 = vsyncpa [#allocation3], 1
    %91 = vsyncpa [#allocation6], 1
    %92 = vsyncpa [#allocation4], 1

</llo_original>
